<compile_context>
chip_gen: v7x
topology: tpu7x:2x2x1
jax: 0.10.0
libtpu: 0.0.40
codegen_flags: <defaults>
</compile_context>

<pallas_src>
import functools

import jax
import jax.numpy as jnp
from jax import lax
from jax.experimental import pallas as pl
from jax.experimental.pallas import tpu as pltpu

_LANES = 128          # TPU lane width; param buffer / wide output padded to this
_W2_ROWS = _LANES     # second-layer weight row-padded to full lane count
_SMALL_BATCH = 512    # <= this: single grid step + lane-dense 128-wide output
_VMEM_LIMIT = 32 * 1024 * 1024  # explicit scoped-VMEM cap, portable v5e/v6e/v7x


def _round_up(n, m):
    return ((n + m - 1) // m) * m


def _packed_param_rows(num_inputs):
    # rows: [ W1 (num_inputs) | b1 (1) | W2 (_W2_ROWS) | b2 (1) ], padded to x8
    return _round_up(num_inputs + 1 + _W2_ROWS + 1, 8)


def pack_params(params, num_inputs, num_outputs, hidden):
    """Fuse the 8 Linear tensors into one lane-padded (rows, 128) f32 slab."""
    # Explicit lane-layout guards (review correctness concern #1).
    assert 2 * hidden <= _LANES, "fused hidden layer [wc1|wa1] must fit 128 lanes"
    assert 1 + 2 * num_outputs <= _LANES, "[value|mu|log_std] must fit 128 lanes"

    hid2 = 2 * hidden
    outw = 1 + 2 * num_outputs
    rows = _packed_param_rows(num_inputs)
    buf = jnp.zeros((rows, _LANES), jnp.float32)

    # fused first layer: [wc1 | wa1], [bc1 | ba1]
    w1 = jnp.concatenate([params["wc1"], params["wa1"]], axis=1)   # (NI, 2H)
    b1 = jnp.concatenate([params["bc1"], params["ba1"]], axis=1)   # (1, 2H)
    # fused second layer: block-diagonal [value | mu | log_std] projection
    w2 = jnp.zeros((hid2, outw), jnp.float32)
    w2 = w2.at[:hidden, 0:1].set(params["wc2"])
    w2 = w2.at[hidden:, 1:].set(params["wa2"])
    b2 = jnp.concatenate([params["bc2"], params["ba2"]], axis=1)   # (1, 1+2O)

    buf = buf.at[0:num_inputs, 0:hid2].set(w1)
    buf = buf.at[num_inputs, 0:hid2].set(b1[0])
    buf = buf.at[num_inputs + 1:num_inputs + 1 + hid2, 0:outw].set(w2)
    buf = buf.at[num_inputs + 1 + _W2_ROWS, 0:outw].set(b2[0])
    return buf


def _actor_critic_kernel(x_ref, p_ref, out_ref, *, num_inputs, num_outputs, hidden):
    out_lanes = out_ref.shape[-1]                             # 128 (small) or narrow
    x = x_ref[...]                                            # (TB, NI)
    p = p_ref[...]                                            # (rows, 128)

    w1 = p[0:num_inputs, :]                                   # (NI, 128) [wc1|wa1|0]
    b1 = p[num_inputs:num_inputs + 1, :]                      # (1, 128)
    w2 = p[num_inputs + 1:num_inputs + 1 + _W2_ROWS, :]       # (128, 128) blockdiag
    b2 = p[num_inputs + 1 + _W2_ROWS:num_inputs + 2 + _W2_ROWS, :]  # (1, 128)

    # fused first layer: one MXU issue for both heads
    h = jnp.dot(x, w1, preferred_element_type=jnp.float32) + b1      # (TB, 128)
    lane = lax.broadcasted_iota(jnp.int32, h.shape, 1)
    # lanes [0, hidden): critic -> ReLU ; lanes [hidden, ...): actor -> tanh
    # (padded lanes are exactly 0 and multiply zero W2 rows, so harmless)
    h = jnp.where(lane < hidden, jnp.maximum(h, 0.0), jnp.tanh(h))

    # fused second layer: one MXU issue -> [value | mu | log_std | 0...]
    out = jnp.dot(h, w2, preferred_element_type=jnp.float32) + b2    # (TB, 128)
    col = lax.broadcasted_iota(jnp.int32, out.shape, 1)
    is_log_std = (col >= 1 + num_outputs) & (col < 1 + 2 * num_outputs)
    out = jnp.where(is_log_std, jnp.exp(out), out)

    # NOTE (review correctness concern #2): when batch % tile != 0, the padded
    # rows of the last x tile hold unspecified data, so tanh/exp above may
    # produce Inf in those rows.  Those output rows are discarded by Pallas;
    # results stay correct -- do not "fix" this by NaN-checking the whole slab.
    if out_lanes == _LANES:
        out_ref[...] = out                      # unmasked lane-dense vst
    else:
        out_ref[...] = out[:, :out_lanes]       # narrow writeback (~16x fewer bytes)


def actor_critic_forward(x, packed_params, num_outputs, hidden, *, batch_tile=2048):
    """Run the fused ActorCritic forward. Returns (mu, sigma, value);
    the policy distribution is Normal(mu, sigma)."""
    batch, num_inputs = x.shape
    rows = packed_params.shape[0]
    assert rows == _packed_param_rows(num_inputs)
    assert 2 * hidden <= _LANES and 1 + 2 * num_outputs <= _LANES

    if batch <= _SMALL_BATCH:
        # Overhead-bound regime: single grid step, lane-dense unmasked 128-lane
        # store (one writeback DMA); one step keeps fixed per-step cost minimal.
        tb = batch
        out_lanes = _LANES
    else:
        # Large-batch regime: >= 2 grid steps (so v7x's second TensorCore gets
        # work via the "parallel" axis), tile capped at batch_tile (=2048 by
        # default; ~4 MiB of double-buffered VMEM -> fits every generation's
        # scoped cap), and a narrow output slab to shrink HBM writeback ~16x.
        tb = min(batch_tile, _round_up(pl.cdiv(batch, 2), 8))
        out_lanes = _round_up(1 + 2 * num_outputs, 8)
    grid = (pl.cdiv(batch, tb),)

    kernel = functools.partial(
        _actor_critic_kernel,
        num_inputs=num_inputs, num_outputs=num_outputs, hidden=hidden)

    flops = 2 * batch * num_inputs * _LANES + 2 * batch * _LANES * _LANES
    bytes_accessed = 4 * (x.size + packed_params.size + batch * out_lanes)
    cost = pl.CostEstimate(flops=flops,
                           transcendentals=batch * (hidden + num_outputs),
                           bytes_accessed=bytes_accessed)

    # Review note (item 7): the params slab is grid-invariant and could be
    # single-buffered via pipeline_mode=pl.Buffered(buffer_count=1); at the
    # tile sizes chosen here total double-buffered VMEM is only ~4 MiB -- far
    # below every generation's scoped cap -- so the ~70 KiB it would free is
    # not needed and the default (maximally portable) spec is kept.
    slab = pl.pallas_call(
        kernel,
        out_shape=jax.ShapeDtypeStruct((batch, out_lanes), jnp.float32),
        grid=grid,
        in_specs=[
            pl.BlockSpec((tb, num_inputs), lambda i: (i, 0)),   # x batch tile
            pl.BlockSpec((rows, _LANES), lambda i: (0, 0)),     # packed params
        ],
        out_specs=pl.BlockSpec((tb, out_lanes), lambda i: (i, 0)),
        compiler_params=pltpu.CompilerParams(
            dimension_semantics=("parallel",),
            vmem_limit_bytes=_VMEM_LIMIT),
        cost_estimate=cost,
    )(x, packed_params)

    # Slice the slab ONCE to the useful columns, then split the narrow array
    # (avoids three independent strided passes over the wide slab).
    useful = slab[:, :1 + 2 * num_outputs]
    value = useful[:, 0:1]
    mu = useful[:, 1:1 + num_outputs]
    sigma = useful[:, 1 + num_outputs:1 + 2 * num_outputs]
    return mu, sigma, value


def init_params(key, num_inputs, num_outputs, hidden_size=10, std=0.1, bias_const=0.1):
    """Matches nn.init.normal_(std=0.1) / constant_(0.1). Weights stored (in, out)."""
    ks = jax.random.split(key, 4)
    return {
        # critic
        "wc1": std * jax.random.normal(ks[0], (num_inputs, hidden_size), jnp.float32),
        "bc1": jnp.full((1, hidden_size), bias_const, jnp.float32),
        "wc2": std * jax.random.normal(ks[1], (hidden_size, 1), jnp.float32),
        "bc2": jnp.full((1, 1), bias_const, jnp.float32),
        # actor
        "wa1": std * jax.random.normal(ks[2], (num_inputs, hidden_size), jnp.float32),
        "ba1": jnp.full((1, hidden_size), bias_const, jnp.float32),
        "wa2": std * jax.random.normal(ks[3], (hidden_size, 2 * num_outputs), jnp.float32),
        "ba2": jnp.full((1, 2 * num_outputs), bias_const, jnp.float32),
    }


def _reference_forward(x, params, num_outputs):
    """Pure-JAX reference mirroring the PyTorch forward, for validation."""
    h_c = jnp.maximum(x @ params["wc1"] + params["bc1"], 0.0)
    value = h_c @ params["wc2"] + params["bc2"]
    h_a = jnp.tanh(x @ params["wa1"] + params["ba1"])
    a = h_a @ params["wa2"] + params["ba2"]
    return a[:, :num_outputs], jnp.exp(a[:, num_outputs:]), value


def _check(x, params, packed, fwd, num_outputs):
    mu, sigma, value = fwd(x, packed)
    jax.block_until_ready((mu, sigma, value))
    mu_r, sigma_r, value_r = _reference_forward(x, params, num_outputs)
    assert jnp.allclose(mu, mu_r, atol=1e-5), "mu mismatch"
    assert jnp.allclose(sigma, sigma_r, atol=1e-5), "sigma mismatch"
    assert jnp.allclose(value, value_r, atol=1e-5), "value mismatch"


if __name__ == "__main__":
    NUM_INPUTS = 4
    NUM_OUTPUTS = 2
    HIDDEN = 10

    key = jax.random.PRNGKey(0)
    k_x1, k_x2, k_p = jax.random.split(key, 3)

    params = init_params(k_p, NUM_INPUTS, NUM_OUTPUTS, HIDDEN)
    packed = pack_params(params, NUM_INPUTS, NUM_OUTPUTS, HIDDEN)

    # TODO(synk): torch.distributions.Normal has no in-kernel equivalent; the
    # kernel emits (mu, sigma) and the caller builds the distribution.
    fwd = jax.jit(functools.partial(actor_critic_forward,
                                    num_outputs=NUM_OUTPUTS, hidden=HIDDEN))

    # Small-batch path: single grid step, lane-dense 128-wide output slab.
    x_small = jax.random.normal(k_x1, (8, NUM_INPUTS), jnp.float32)
    _check(x_small, params, packed, fwd, NUM_OUTPUTS)

    # Tiled path: >= 2 grid steps, narrow output writeback, partial last tile
    # (1034 rows -> tiles of 520, last tile padded).  Still tiny data.
    x_big = jax.random.normal(k_x2, (1034, NUM_INPUTS), jnp.float32)
    _check(x_big, params, packed, fwd, NUM_OUTPUTS)

    print("KERNEL_OK")
</pallas_src>

<mosaic_0001>
module attributes {stable_mosaic.version = 11 : i64} {
  func.func @_actor_critic_kernel(%arg0: i32, %arg1: memref<8x4xf32, #tpu.memory_space<vmem>>, %arg2: memref<136x128xf32, #tpu.memory_space<vmem>>, %arg3: memref<8x128xf32, #tpu.memory_space<vmem>>) attributes {dimension_semantics = [#tpu.dimension_semantics<parallel>], iteration_bounds = array<i64: 1>, scalar_prefetch = 0 : i64, scratch_operands = 0 : i64, tpu.core_type = #tpu.core_type<tc>, window_params = [{transform_indices = @transform_0, window_bounds = array<i64: 8, 4>}, {pipeline_mode = #tpu.pipeline_mode<synchronous>, transform_indices = @transform_1, window_bounds = array<i64: 136, 128>}, {transform_indices = @transform_2, window_bounds = array<i64: 8, 128>}]} {
    %c0 = arith.constant 0 : index
    %c0_0 = arith.constant 0 : index
    %0 = vector.load %arg1[%c0, %c0_0] : memref<8x4xf32, #tpu.memory_space<vmem>>, vector<8x4xf32>
    %c0_1 = arith.constant 0 : index
    %c0_2 = arith.constant 0 : index
    %1 = vector.load %arg2[%c0_1, %c0_2] : memref<136x128xf32, #tpu.memory_space<vmem>>, vector<136x128xf32>
    %2 = vector.extract_strided_slice %1 {offsets = [0, 0], sizes = [4, 128], strides = [1, 1]} : vector<136x128xf32> to vector<4x128xf32>
    %3 = vector.extract_strided_slice %1 {offsets = [4, 0], sizes = [1, 128], strides = [1, 1]} : vector<136x128xf32> to vector<1x128xf32>
    %4 = vector.extract_strided_slice %1 {offsets = [5, 0], sizes = [128, 128], strides = [1, 1]} : vector<136x128xf32> to vector<128x128xf32>
    %5 = vector.extract_strided_slice %1 {offsets = [133, 0], sizes = [1, 128], strides = [1, 1]} : vector<136x128xf32> to vector<1x128xf32>
    %cst = arith.constant dense<0.000000e+00> : vector<8x128xf32>
    %6 = tpu.matmul %0, %2, %cst {dimension_numbers = #tpu.dot_dimension_numbers<[1], [0], [0], [1], [0, 0, 1, 1], [], []>} : vector<8x4xf32>, vector<4x128xf32>, vector<8x128xf32> -> vector<8x128xf32>
    %7 = vector.broadcast %3 : vector<1x128xf32> to vector<8x128xf32>
    %8 = arith.addf %6, %7 : vector<8x128xf32>
    %9 = tpu.iota {dimensions = array<i32: 1>} : vector<8x128xi32>
    %c10_i32 = arith.constant 10 : i32
    %10 = vector.broadcast %c10_i32 : i32 to vector<8x128xi32>
    %11 = arith.cmpi slt, %9, %10 : vector<8x128xi32>
    %cst_3 = arith.constant 0.000000e+00 : f32
    %12 = vector.broadcast %cst_3 : f32 to vector<8x128xf32>
    %13 = arith.maximumf %8, %12 : vector<8x128xf32>
    %14 = math.tanh %8 : vector<8x128xf32>
    %15 = arith.select %11, %13, %14 : vector<8x128xi1>, vector<8x128xf32>
    %cst_4 = arith.constant dense<0.000000e+00> : vector<8x128xf32>
    %16 = tpu.matmul %15, %4, %cst_4 {dimension_numbers = #tpu.dot_dimension_numbers<[1], [0], [0], [1], [0, 0, 1, 1], [], []>} : vector<8x128xf32>, vector<128x128xf32>, vector<8x128xf32> -> vector<8x128xf32>
    %17 = vector.broadcast %5 : vector<1x128xf32> to vector<8x128xf32>
    %18 = arith.addf %16, %17 : vector<8x128xf32>
    %19 = tpu.iota {dimensions = array<i32: 1>} : vector<8x128xi32>
    %c3_i32 = arith.constant 3 : i32
    %20 = vector.broadcast %c3_i32 : i32 to vector<8x128xi32>
    %21 = arith.cmpi sge, %19, %20 : vector<8x128xi32>
    %c5_i32 = arith.constant 5 : i32
    %22 = vector.broadcast %c5_i32 : i32 to vector<8x128xi32>
    %23 = arith.cmpi slt, %19, %22 : vector<8x128xi32>
    %24 = arith.andi %21, %23 : vector<8x128xi1>
    %25 = math.exp %18 : vector<8x128xf32>
    %26 = arith.select %24, %25, %18 : vector<8x128xi1>, vector<8x128xf32>
    %c0_5 = arith.constant 0 : index
    %c0_6 = arith.constant 0 : index
    %27 = vector.load %arg3[%c0_5, %c0_6] : memref<8x128xf32, #tpu.memory_space<vmem>>, vector<8x128xf32>
    tpu.vector_store %arg3[%c0_5, %c0_6], %26 {strides = array<i32>} : memref<8x128xf32, #tpu.memory_space<vmem>>, vector<8x128xf32>,
    return
  }
  func.func @transform_0(%arg0: i32) -> (i32, i32) {
    %c0_i32 = arith.constant 0 : i32
    %c0_i32_0 = arith.constant 0 : i32
    return %arg0, %c0_i32 : i32, i32
  }
  func.func @transform_1(%arg0: i32) -> (i32, i32) {
    %c0_i32 = arith.constant 0 : i32
    %c0_i32_0 = arith.constant 0 : i32
    %c0_i32_1 = arith.constant 0 : i32
    return %c0_i32, %c0_i32_0 : i32, i32
  }
  func.func @transform_2(%arg0: i32) -> (i32, i32) {
    %c0_i32 = arith.constant 0 : i32
    %c0_i32_0 = arith.constant 0 : i32
    return %arg0, %c0_i32 : i32, i32
  }
}

</mosaic_0001>

<llo_original>
// kernel: actor_critic_forward.1
$region0: #{actor_critic_forward.1}
  #allocation0 [shape = 'u32[]', space=smem, size = 0x4, offset = 0x4, fixed_abs, tag = 'smem constant byte address 0x4 - core index']
  #allocation1 [shape = 'u32[144,128]{1,0:T(1,128)}', space=vmem, size = 0x12000, scoped, tag = 'internal scratch']
  %s0 = inlined_call_operand.vmem [shape: f32[8,4], index: 0, kind: input, shape index: {}]
  %s1 = inlined_call_operand.hbm [shape: f32[136,128], index: 1, kind: input, shape index: {}]
  %s2 = inlined_call_operand.vmem [shape: f32[8,128], index: 2, kind: output, shape index: {}]
  %s3 = sld [smem:[#allocation0]]
  $region22: #{actor_critic_forward.1} parent=0
    _
  %s5 = ssub.s32 1, %s3
  %s6 = scalar_select 0, %s5, %s3
  $region1: #{actor_critic_forward.1} parent=0
    #allocation2 [shape = 'u8[69632]{0}', space=vmem, size = 0x11000, scoped, tag = 'input window, operand 1, single buffered']
    #allocation3 [shape = 's32[1]{0}', space=sflag, size = 0x4, scoped, tag = 'scoped memory for actor_critic_forward.1']
    %7 = vsyncpa [#allocation3], 0
    // Predicated region
    $region2: #{actor_critic_forward.1} parent=1 // pred_check
      _
    $region3: #{actor_critic_forward.1} parent=1 // pred_check_branch
      %9 = sbr.rel (0) target = $region5
    $region4: #{actor_critic_forward.1} parent=1 // pred_region
      _
    $region5: #{actor_critic_forward.1} parent=1 // pred_fallthru
      _
    // Predicated region
    $region6: #{actor_critic_forward.1} parent=1 // pred_check
      _
    $region7: #{actor_critic_forward.1} parent=1 // pred_check_branch
      %11 = sbr.rel (0) target = $region9
    $region8: #{actor_critic_forward.1} parent=1 // pred_region
      %s13 = ssub.s32 2176, 2176
      %14 = vsyncadd [#allocation3], %s13
      %s15 = sshll.u32 [#allocation2], 4
      %s16 = int_to_ptr.vmem [resolvable:$true] %s15
      %21 = dma.hbm_to_vmem [thread:$0]  %s1, 2176, %s16, [#allocation3], 128, 128, 8
    $region9: #{actor_critic_forward.1} parent=1 // pred_fallthru
      _
    // Predicated region
    $region10: #{actor_critic_forward.1} parent=1 // pred_check
      _
    $region11: #{actor_critic_forward.1} parent=1 // pred_check_branch
      %23 = sbr.rel (0) target = $region13
    $region12: #{actor_critic_forward.1} parent=1 // pred_region
      %24 = dma.done [#allocation3], 2176
    $region13: #{actor_critic_forward.1} parent=1 // pred_fallthru
      _
    %v25 = vld [vmem:[%s0] sm:$0xff]
    %v26 = vld [vmem:[#allocation2] sm:$0xff]
    %v27 = vld [vmem:[#allocation2 + $0x8] sm:$0xff]
    %v28 = vld [vmem:[#allocation2 + $0x10] sm:$0xff]
    %v29 = vld [vmem:[#allocation2 + $0x18] sm:$0xff]
    %v30 = vld [vmem:[#allocation2 + $0x20] sm:$0xff]
    %v31 = vld [vmem:[#allocation2 + $0x28] sm:$0xff]
    %v32 = vld [vmem:[#allocation2 + $0x30] sm:$0xff]
    %v33 = vld [vmem:[#allocation2 + $0x38] sm:$0xff]
    %v34 = vld [vmem:[#allocation2 + $0x40] sm:$0xff]
    %v35 = vld [vmem:[#allocation2 + $0x48] sm:$0xff]
    %v36 = vld [vmem:[#allocation2 + $0x50] sm:$0xff]
    %v37 = vld [vmem:[#allocation2 + $0x58] sm:$0xff]
    %v38 = vld [vmem:[#allocation2 + $0x60] sm:$0xff]
    %v39 = vld [vmem:[#allocation2 + $0x68] sm:$0xff]
    %v40 = vld [vmem:[#allocation2 + $0x70] sm:$0xff]
    %v41 = vld [vmem:[#allocation2 + $0x78] sm:$0xff]
    %v42 = vld [vmem:[#allocation2 + $0x80] sm:$0xff]
    %v43 = vlaneseq
    %v44 = vshrl.u32 %v43, 7
    %v45 = vsub.s32 4, %v44
    %v46 = vrot.slane %v26, %v45
    %vm47 = vcmask 31744
    %v49 = vsel %vm47, %v25, 0
    %vm51 = vcmask 1043456
    %v53 = vsel %vm51, %v26, 0
    %55 = vmatprep.subr.mxu0 0.0
    %56 = vmatpush1.msra.mxu0 %v53
    %57 = vmatprep.subr.mxu0 0.0
    %58 = vmatpush1.msra.mxu0 0.0
    %59 = vmatprep.subr.mxu0 0.0
    %60 = vmatpush1.msra.mxu0 0.0
    %61 = vmatprep.subr.mxu0 0.0
    %62 = vmatpush1.msra.mxu0 0.0
    %63 = vmatprep.subr.mxu0 0.0
    %64 = vmatpush1.msra.mxu0 0.0
    %65 = vmatprep.subr.mxu0 0.0
    %66 = vmatpush1.msra.mxu0 0.0
    %67 = vmatprep.subr.mxu0 0.0
    %68 = vmatpush1.msra.mxu0 0.0
    %69 = vmatprep.subr.mxu0 0.0
    %70 = vmatpush1.msra.mxu0 0.0
    %71 = vmatprep.subr.mxu0 0.0
    %72 = vmatpush1.msra.mxu0 0.0
    %73 = vmatprep.subr.mxu0 0.0
    %74 = vmatpush1.msra.mxu0 0.0
    %75 = vmatprep.subr.mxu0 0.0
    %76 = vmatpush1.msra.mxu0 0.0
    %77 = vmatprep.subr.mxu0 0.0
    %78 = vmatpush1.msra.mxu0 0.0
    %79 = vmatprep.subr.mxu0 0.0
    %80 = vmatpush1.msra.mxu0 0.0
    %81 = vmatprep.subr.mxu0 0.0
    %82 = vmatpush1.msra.mxu0 0.0
    %83 = vmatprep.subr.mxu0 0.0
    %84 = vmatpush1.msra.mxu0 0.0
    %85 = vmatprep.subr.mxu0 0.0
    %86 = vmatpush1.msra.mxu0 0.0
    %87 = vmatprep.subr.mxu0 0.0
    %88 = vmatpush1.msra.mxu0 0.0
    %89 = vmatprep.subr.mxu0 0.0
    %90 = vmatpush1.msra.mxu0 0.0
    %91 = vmatprep.subr.mxu0 0.0
    %92 = vmatpush1.msra.mxu0 0.0
    %93 = vmatprep.subr.mxu0 0.0
    %94 = vmatpush1.msra.mxu0 0.0
    %95 = vmatprep.subr.mxu0 0.0
    %96 = vmatpush1.msra.mxu0 0.0
    %97 = vmatprep.subr.mxu0 0.0
    %98 = vmatpush1.msra.mxu0 0.0
    %99 = vmatprep.subr.mxu0 0.0
    %100 = vmatpush1.msra.mxu0 0.0
    %101 = vmatprep.subr.mxu0 0.0
    %102 = vmatpush1.msra.mxu0 0.0
    %103 = vmatprep.subr.mxu0 0.0
    %104 = vmatpush1.msra.mxu0 0.0
    %105 = vmatprep.subr.mxu0 0.0
    %106 = vmatpush1.msra.mxu0 0.0
    %107 = vmatprep.subr.mxu0 0.0
    %108 = vmatpush1.msra.mxu0 0.0
    %109 = vmatprep.subr.mxu0 0.0
    %110 = vmatpush1.msra.mxu0 0.0
    %111 = vmatprep.subr.mxu0 0.0
    %112 = vmatpush1.msra.mxu0 0.0
    %113 = vmatprep.subr.mxu0 0.0
    %114 = vmatpush1.msra.mxu0 0.0
    %115 = vmatprep.subr.mxu0 0.0
    %116 = vmatpush1.msra.mxu0 0.0
    %117 = vmatprep.subr.mxu0 0.0
    %118 = vmatpush1.msra.mxu0 0.0
    %119 = vmatprep.mubr.f32.mxu0 0.0
    %120 = vmatmul.mubr.f32.gmra.mrb[0].mxu0 %v49
    %v121 = vpop.f32.mrb[0].mxu0
    %v122 = vadd.f32 %v46, %v121
    %v123 = vpop.f32.mrb[0].mxu0
    %124 = vdwg.mxu0
    %v125 = vlaneseq
    %v126 = vand.u32 %v125, 127
    %vm127 = vcmp.lt.s32.totalorder %v126, 10
    %v128 = vmax.f32 %v122, 0.0
    %v129 = vtanh.pop %v122
    %v130 = vsel %vm127, %v128, %v129
    %v131 = vlaneseq
    %v132 = vshrl.u32 %v131, 7
    %v133 = vsub.s32 5, %v132
    %v134 = vrot.slane %v42, %v133
    %vm151 = vcmask 1042432
    %v152 = vrot.slane %v26, 5
    %v153 = vrot.slane %v27, 5
    %v154 = vsel %vm151, %v152, %v153
    %v155 = vrot.slane %v28, 5
    %v156 = vsel %vm151, %v153, %v155
    %v157 = vrot.slane %v29, 5
    %v158 = vsel %vm151, %v155, %v157
    %v159 = vrot.slane %v30, 5
    %v160 = vsel %vm151, %v157, %v159
    %v161 = vrot.slane %v31, 5
    %v162 = vsel %vm151, %v159, %v161
    %v163 = vrot.slane %v32, 5
    %v164 = vsel %vm151, %v161, %v163
    %v165 = vrot.slane %v33, 5
    %v166 = vsel %vm151, %v163, %v165
    %v167 = vrot.slane %v34, 5
    %v168 = vsel %vm151, %v165, %v167
    %v169 = vrot.slane %v35, 5
    %v170 = vsel %vm151, %v167, %v169
    %v171 = vrot.slane %v36, 5
    %v172 = vsel %vm151, %v169, %v171
    %v173 = vrot.slane %v37, 5
    %v174 = vsel %vm151, %v171, %v173
    %v175 = vrot.slane %v38, 5
    %v176 = vsel %vm151, %v173, %v175
    %v177 = vrot.slane %v39, 5
    %v178 = vsel %vm151, %v175, %v177
    %v179 = vrot.slane %v40, 5
    %v180 = vsel %vm151, %v177, %v179
    %v181 = vrot.slane %v41, 5
    %v182 = vsel %vm151, %v179, %v181
    %v183 = vrot.slane %v42, 5
    %v184 = vsel %vm151, %v181, %v183
    %201 = vmatprep.subr.mxu0 0.0
    %202 = vmatpush1.msra.mxu0 %v154
    %203 = vmatprep.subr.mxu0 0.0
    %204 = vmatpush1.msra.mxu0 %v156
    %205 = vmatprep.subr.mxu0 0.0
    %206 = vmatpush1.msra.mxu0 %v158
    %207 = vmatprep.subr.mxu0 0.0
    %208 = vmatpush1.msra.mxu0 %v160
    %209 = vmatprep.subr.mxu0 0.0
    %210 = vmatpush1.msra.mxu0 %v162
    %211 = vmatprep.subr.mxu0 0.0
    %212 = vmatpush1.msra.mxu0 %v164
    %213 = vmatprep.subr.mxu0 0.0
    %214 = vmatpush1.msra.mxu0 %v166
    %215 = vmatprep.subr.mxu0 0.0
    %216 = vmatpush1.msra.mxu0 %v168
    %217 = vmatprep.subr.mxu0 0.0
    %218 = vmatpush1.msra.mxu0 %v170
    %219 = vmatprep.subr.mxu0 0.0
    %220 = vmatpush1.msra.mxu0 %v172
    %221 = vmatprep.subr.mxu0 0.0
    %222 = vmatpush1.msra.mxu0 %v174
    %223 = vmatprep.subr.mxu0 0.0
    %224 = vmatpush1.msra.mxu0 %v176
    %225 = vmatprep.subr.mxu0 0.0
    %226 = vmatpush1.msra.mxu0 %v178
    %227 = vmatprep.subr.mxu0 0.0
    %228 = vmatpush1.msra.mxu0 %v180
    %229 = vmatprep.subr.mxu0 0.0
    %230 = vmatpush1.msra.mxu0 %v182
    %231 = vmatprep.subr.mxu0 0.0
    %232 = vmatpush1.msra.mxu0 %v184
    %233 = vmatprep.subr.mxu0 0.0
    %234 = vmatpush1.msra.mxu0 0.0
    %235 = vmatprep.subr.mxu0 0.0
    %236 = vmatpush1.msra.mxu0 0.0
    %237 = vmatprep.subr.mxu0 0.0
    %238 = vmatpush1.msra.mxu0 0.0
    %239 = vmatprep.subr.mxu0 0.0
    %240 = vmatpush1.msra.mxu0 0.0
    %241 = vmatprep.subr.mxu0 0.0
    %242 = vmatpush1.msra.mxu0 0.0
    %243 = vmatprep.subr.mxu0 0.0
    %244 = vmatpush1.msra.mxu0 0.0
    %245 = vmatprep.subr.mxu0 0.0
    %246 = vmatpush1.msra.mxu0 0.0
    %247 = vmatprep.subr.mxu0 0.0
    %248 = vmatpush1.msra.mxu0 0.0
    %249 = vmatprep.subr.mxu0 0.0
    %250 = vmatpush1.msra.mxu0 0.0
    %251 = vmatprep.subr.mxu0 0.0
    %252 = vmatpush1.msra.mxu0 0.0
    %253 = vmatprep.subr.mxu0 0.0
    %254 = vmatpush1.msra.mxu0 0.0
    %255 = vmatprep.subr.mxu0 0.0
    %256 = vmatpush1.msra.mxu0 0.0
    %257 = vmatprep.subr.mxu0 0.0
    %258 = vmatpush1.msra.mxu0 0.0
    %259 = vmatprep.subr.mxu0 0.0
    %260 = vmatpush1.msra.mxu0 0.0
    %261 = vmatprep.subr.mxu0 0.0
    %262 = vmatpush1.msra.mxu0 0.0
    %263 = vmatprep.subr.mxu0 0.0
    %264 = vmatpush1.msra.mxu0 0.0
    %265 = vmatprep.mubr.f32.mxu0 0.0
    %266 = vmatmul.mubr.f32.gmra.mrb[0].mxu0 %v130
    %v267 = vpop.f32.mrb[0].mxu0
    %v268 = vadd.f32 %v134, %v267
    %v269 = vpop.f32.mrb[0].mxu0
    %270 = vdwg.mxu0
    %vm271 = vcmp.ge.s32.totalorder %v126, 3
    %vm272 = vcmp.lt.s32.totalorder %v126, 5
    %vm273 = vmand %vm271, %vm272
    %v274 = vmul.f32 %v268, 1.442695
    %v275 = vpow.pop %v274
    %v276 = vsel %vm273, %v275, %v268
    %277 = vst [vmem:[%s2] sm:$0xff] %v276
    // Predicated region
    $region14: #{actor_critic_forward.1} parent=1 // pred_check
      _
    $region15: #{actor_critic_forward.1} parent=1 // pred_check_branch
      %279 = sbr.rel (0) target = $region17
    $region16: #{actor_critic_forward.1} parent=1 // pred_region
      _
    $region17: #{actor_critic_forward.1} parent=1 // pred_fallthru
      _
    // Predicated region
    $region18: #{actor_critic_forward.1} parent=1 // pred_check
      _
    $region19: #{actor_critic_forward.1} parent=1 // pred_check_branch
      %281 = sbr.rel (0) target = $region21
    $region20: #{actor_critic_forward.1} parent=1 // pred_region
      _
    $region21: #{actor_critic_forward.1} parent=1 // pred_fallthru
      _
    %282 = vsyncpa [#allocation3], 1

</llo_original>
